<compile_context>
chip_gen: v7x
topology: tpu7x:2x2x1
jax: 0.10.0
libtpu: 0.0.40
codegen_flags: <defaults>
</compile_context>

<pallas_src>
import functools

import jax
import jax.numpy as jnp
from jax.experimental import pallas as pl
from jax.experimental.pallas import tpu as pltpu


def _attention_kernel(x_ref, wqkv_ref, wout_ref, o_ref, qkv_ref, ctx_ref, *,
                      seq_pad, seq, heads, dim_head):
    # x_ref:    (seq_pad, d_pad)      bf16   (one batch element)
    # wqkv_ref: (d_pad, 3*inner)      bf16   (softmax scale folded into Q cols)
    # wout_ref: (inner, d_pad)        bf16
    # o_ref:    (seq_pad, d_pad)      out_dtype
    # qkv_ref:  (seq_pad, 3*inner)    bf16 scratch
    # ctx_ref:  (seq_pad, inner)      bf16 scratch
    inner = heads * dim_head

    # Fused QKV projection; single f32 -> bf16 cast into VMEM scratch.
    qkv = jnp.dot(x_ref[...], wqkv_ref[...],
                  preferred_element_type=jnp.float32)
    qkv_ref[...] = qkv.astype(jnp.bfloat16)

    need_mask = seq != seq_pad
    if need_mask:
        # Padded key columns must be masked: zero-padded keys are NOT a no-op
        # under softmax.
        key_idx = jax.lax.broadcasted_iota(jnp.int32, (seq_pad, seq_pad), 1)
        key_mask = key_idx < seq

    for h in range(heads):
        c0 = h * dim_head
        # Per-head slabs read straight from the bf16 scratch ref (no slicing of
        # a traced f32 value, no per-slice casts).
        q = qkv_ref[:, c0:c0 + dim_head]
        k = qkv_ref[:, inner + c0:inner + c0 + dim_head]
        v = qkv_ref[:, 2 * inner + c0:2 * inner + c0 + dim_head]

        # dots = q @ k^T (contraction on the head dim, no explicit transpose).
        dots = jax.lax.dot_general(
            q, k, dimension_numbers=(((1,), (1,)), ((), ())),
            preferred_element_type=jnp.float32)          # (seq_pad, seq_pad) f32
        if need_mask:
            dots = jnp.where(key_mask, dots, -1e30)

        # Numerically stable softmax; elementwise math stays f32, denom on EUP.
        m = jnp.max(dots, axis=-1, keepdims=True)
        p = jnp.exp(dots - m)
        attn = p * pl.reciprocal(jnp.sum(p, axis=-1, keepdims=True),
                                 approx=True)

        # ctx_h = attn @ v -> written into its head slot of the ctx scratch.
        ctx = jnp.dot(attn.astype(jnp.bfloat16), v,
                      preferred_element_type=jnp.float32)
        ctx_ref[:, c0:c0 + dim_head] = ctx.astype(jnp.bfloat16)

    # One output projection with full contraction depth K = inner; emit the
    # result directly in the caller's dtype.
    o_ref[...] = jnp.dot(ctx_ref[...], wout_ref[...],
                         preferred_element_type=jnp.float32).astype(o_ref.dtype)


def attention_pallas(x, w_qkv, w_out, heads):
    """x: (B, N, D); w_qkv: (D, 3*inner); w_out: (inner, D)  (stored as (in, out))."""
    b, n, d = x.shape
    out_dtype = x.dtype
    three_inner = w_qkv.shape[1]
    inner = three_inner // 3
    dim_head = inner // heads
    scale = float(dim_head) ** (-0.5)

    # Fold the softmax scale into the Q columns of Wqkv (linear -> exact).
    w_qkv = jnp.concatenate([w_qkv[:, :inner] * scale, w_qkv[:, inner:]], axis=1)

    # Lane-dense last dim (D -> multiple of 128) and sublane-aligned sequence
    # length (N -> multiple of 8). D padding is a provable no-op; N padding is
    # handled by key masking inside the kernel.
    d_pad = ((d + 127) // 128) * 128
    n_pad = ((n + 7) // 8) * 8
    if d_pad != d or n_pad != n:
        x = jnp.pad(x, ((0, 0), (0, n_pad - n), (0, d_pad - d)))
    if d_pad != d:
        w_qkv = jnp.pad(w_qkv, ((0, d_pad - d), (0, 0)))
        w_out = jnp.pad(w_out, ((0, 0), (0, d_pad - d)))

    # bf16 MXU operands (halves HBM->VMEM traffic); accumulation is f32 in-kernel.
    x2 = x.reshape(b * n_pad, d_pad).astype(jnp.bfloat16)
    wqkv_b = w_qkv.astype(jnp.bfloat16)
    wout_b = w_out.astype(jnp.bfloat16)

    # One batch element per grid step: bounded live ranges, pipelined block
    # DMAs, and >=2 steps whenever B >= 2 (v7x megacore sharding).
    grid = (b,)

    # Explicit VMEM budget (double-buffered x/out blocks + weights + scratch),
    # important on v7x where the scoped default is 32 MiB.
    out_bytes = jnp.dtype(out_dtype).itemsize
    vmem_est = (2 * (n_pad * d_pad * 2)             # x block (bf16), 2 buffers
                + 2 * (n_pad * d_pad * out_bytes)   # out block, 2 buffers
                + 2 * (d_pad * three_inner * 2)     # Wqkv (bf16), 2 buffers
                + 2 * (inner * d_pad * 2)           # Wout (bf16), 2 buffers
                + n_pad * three_inner * 2           # qkv scratch (bf16)
                + n_pad * inner * 2)                # ctx scratch (bf16)
    vmem_limit = int(min(max(2 * vmem_est, 32 * 1024 * 1024), 100 * 1024 * 1024))

    kernel = functools.partial(_attention_kernel, seq_pad=n_pad, seq=n,
                               heads=heads, dim_head=dim_head)

    out = pl.pallas_call(
        kernel,
        out_shape=jax.ShapeDtypeStruct((b * n_pad, d_pad), out_dtype),
        grid=grid,
        in_specs=[
            pl.BlockSpec((n_pad, d_pad), lambda i: (i, 0)),
            pl.BlockSpec((d_pad, three_inner), lambda i: (0, 0)),
            pl.BlockSpec((inner, d_pad), lambda i: (0, 0)),
        ],
        out_specs=pl.BlockSpec((n_pad, d_pad), lambda i: (i, 0)),
        scratch_shapes=[
            pltpu.VMEM((n_pad, three_inner), jnp.bfloat16),  # qkv (bf16)
            pltpu.VMEM((n_pad, inner), jnp.bfloat16),        # per-head contexts
        ],
        compiler_params=pltpu.CompilerParams(
            dimension_semantics=("parallel",),
            vmem_limit_bytes=vmem_limit),
    )(x2, wqkv_b, wout_b)

    out = out.reshape(b, n_pad, d_pad)[:, :n, :d]
    return out


def attention_reference(x, w_qkv, w_out, heads):
    """Pure-JAX f32 reference mirroring the PyTorch forward."""
    b, n, d = x.shape
    inner = w_qkv.shape[1] // 3
    dh = inner // heads
    scale = float(dh) ** (-0.5)

    qkv = jnp.einsum('bnd,de->bne', x, w_qkv)
    q, k, v = jnp.split(qkv, 3, axis=-1)

    def to_heads(t):
        return jnp.transpose(t.reshape(b, n, heads, dh), (0, 2, 1, 3))

    q, k, v = map(to_heads, (q, k, v))
    dots = jnp.einsum('bhid,bhjd->bhij', q, k) * scale
    attn = jax.nn.softmax(dots, axis=-1)
    out = jnp.einsum('bhij,bhjd->bhid', attn, v)
    out = jnp.transpose(out, (0, 2, 1, 3)).reshape(b, n, inner)
    return jnp.einsum('bne,ed->bnd', out, w_out)


if __name__ == "__main__":
    # Small, module-consistent shapes: batch=2, seq=8, dim=32, heads=4, dim_head=16
    B, N, DIM = 2, 8, 32
    HEADS, DIM_HEAD = 4, 16
    INNER = HEADS * DIM_HEAD  # 64; project_out=True (heads!=1 or dim_head!=dim)

    key = jax.random.PRNGKey(0)
    kx, kqkv, kout = jax.random.split(key, 3)

    x = jax.random.normal(kx, (B, N, DIM), dtype=jnp.float32)
    # Deterministic synthetic parameters (stored as (in, out)).
    w_qkv = jax.random.normal(kqkv, (DIM, 3 * INNER), dtype=jnp.float32) * 0.05
    w_out = jax.random.normal(kout, (INNER, DIM), dtype=jnp.float32) * 0.05

    y = attention_pallas(x, w_qkv, w_out, HEADS)
    y = jax.block_until_ready(y)

    y_ref = attention_reference(x, w_qkv, w_out, HEADS)
    assert y.shape == (B, N, DIM)
    # bf16 MXU operands with f32 accumulation -> loosened tolerance vs f32 ref.
    assert jnp.allclose(y, y_ref, atol=2e-2, rtol=2e-2), "mismatch vs reference"

    print("KERNEL_OK")
</pallas_src>

<mosaic_0001>
module attributes {stable_mosaic.version = 11 : i64} {
  func.func @_attention_kernel(%arg0: i32, %arg1: memref<8x128xbf16, #tpu.memory_space<vmem>>, %arg2: memref<128x192xbf16, #tpu.memory_space<vmem>>, %arg3: memref<64x128xbf16, #tpu.memory_space<vmem>>, %arg4: memref<8x128xf32, #tpu.memory_space<vmem>>, %arg5: memref<8x192xbf16, #tpu.memory_space<vmem>>, %arg6: memref<8x64xbf16, #tpu.memory_space<vmem>>) attributes {dimension_semantics = [#tpu.dimension_semantics<parallel>], iteration_bounds = array<i64: 2>, scalar_prefetch = 0 : i64, scratch_operands = 2 : i64, tpu.core_type = #tpu.core_type<tc>, window_params = [{transform_indices = @transform_0, window_bounds = array<i64: 8, 128>}, {pipeline_mode = #tpu.pipeline_mode<synchronous>, transform_indices = @transform_1, window_bounds = array<i64: 128, 192>}, {pipeline_mode = #tpu.pipeline_mode<synchronous>, transform_indices = @transform_2, window_bounds = array<i64: 64, 128>}, {transform_indices = @transform_3, window_bounds = array<i64: 8, 128>}]} {
    %c0 = arith.constant 0 : index
    %c0_0 = arith.constant 0 : index
    %0 = vector.load %arg1[%c0, %c0_0] : memref<8x128xbf16, #tpu.memory_space<vmem>>, vector<8x128xbf16>
    %c0_1 = arith.constant 0 : index
    %c0_2 = arith.constant 0 : index
    %1 = vector.load %arg2[%c0_1, %c0_2] : memref<128x192xbf16, #tpu.memory_space<vmem>>, vector<128x192xbf16>
    %cst = arith.constant dense<0.000000e+00> : vector<8x192xf32>
    %2 = tpu.matmul %0, %1, %cst {dimension_numbers = #tpu.dot_dimension_numbers<[1], [0], [0], [1], [0, 0, 1, 1], [], []>} : vector<8x128xbf16>, vector<128x192xbf16>, vector<8x192xf32> -> vector<8x192xf32>
    %3 = arith.truncf %2 : vector<8x192xf32> to vector<8x192xbf16>
    %c0_3 = arith.constant 0 : index
    %c0_4 = arith.constant 0 : index
    %4 = vector.load %arg5[%c0_3, %c0_4] : memref<8x192xbf16, #tpu.memory_space<vmem>>, vector<8x192xbf16>
    tpu.vector_store %arg5[%c0_3, %c0_4], %3 {strides = array<i32>} : memref<8x192xbf16, #tpu.memory_space<vmem>>, vector<8x192xbf16>,
    %c0_5 = arith.constant 0 : index
    %c0_6 = arith.constant 0 : index
    %5 = vector.load %arg5[%c0_5, %c0_6] : memref<8x192xbf16, #tpu.memory_space<vmem>>, vector<8x16xbf16>
    %c0_7 = arith.constant 0 : index
    %c64 = arith.constant 64 : index
    %6 = vector.load %arg5[%c0_7, %c64] : memref<8x192xbf16, #tpu.memory_space<vmem>>, vector<8x16xbf16>
    %c0_8 = arith.constant 0 : index
    %c128 = arith.constant 128 : index
    %7 = vector.load %arg5[%c0_8, %c128] : memref<8x192xbf16, #tpu.memory_space<vmem>>, vector<8x16xbf16>
    %cst_9 = arith.constant dense<0.000000e+00> : vector<8x8xf32>
    %8 = tpu.matmul %5, %6, %cst_9 {dimension_numbers = #tpu.dot_dimension_numbers<[1], [1], [0], [0], [0, 0, 1, 0], [], []>} : vector<8x16xbf16>, vector<8x16xbf16>, vector<8x8xf32> -> vector<8x8xf32>
    %cst_10 = arith.constant dense<0xFF800000> : vector<8xf32>
    %9 = vector.multi_reduction <maximumf>, %8, %cst_10 [1] : vector<8x8xf32> to vector<8xf32>
    %10 = vector.shape_cast %9 : vector<8xf32> to vector<8x1xf32>
    %11 = vector.broadcast %10 : vector<8x1xf32> to vector<8x8xf32>
    %12 = arith.subf %8, %11 : vector<8x8xf32>
    %13 = math.exp %12 : vector<8x8xf32>
    %cst_11 = arith.constant dense<0.000000e+00> : vector<8xf32>
    %14 = vector.multi_reduction <add>, %13, %cst_11 [1] : vector<8x8xf32> to vector<8xf32>
    %15 = vector.shape_cast %14 : vector<8xf32> to vector<8x1xf32>
    %16 = tpu.reciprocal %15 {approx = true} : vector<8x1xf32> -> vector<8x1xf32>
    %17 = vector.broadcast %16 : vector<8x1xf32> to vector<8x8xf32>
    %18 = arith.mulf %13, %17 : vector<8x8xf32>
    %19 = arith.truncf %18 : vector<8x8xf32> to vector<8x8xbf16>
    %cst_12 = arith.constant dense<0.000000e+00> : vector<8x16xf32>
    %20 = tpu.matmul %19, %7, %cst_12 {dimension_numbers = #tpu.dot_dimension_numbers<[1], [0], [0], [1], [0, 0, 1, 1], [], []>} : vector<8x8xbf16>, vector<8x16xbf16>, vector<8x16xf32> -> vector<8x16xf32>
    %21 = arith.truncf %20 : vector<8x16xf32> to vector<8x16xbf16>
    %c0_13 = arith.constant 0 : index
    %c0_14 = arith.constant 0 : index
    %22 = vector.load %arg6[%c0_13, %c0_14] : memref<8x64xbf16, #tpu.memory_space<vmem>>, vector<8x16xbf16>
    tpu.vector_store %arg6[%c0_13, %c0_14], %21 {strides = array<i32>} : memref<8x64xbf16, #tpu.memory_space<vmem>>, vector<8x16xbf16>,
    %c0_15 = arith.constant 0 : index
    %c16 = arith.constant 16 : index
    %23 = vector.load %arg5[%c0_15, %c16] : memref<8x192xbf16, #tpu.memory_space<vmem>>, vector<8x16xbf16>
    %c0_16 = arith.constant 0 : index
    %c80 = arith.constant 80 : index
    %24 = vector.load %arg5[%c0_16, %c80] : memref<8x192xbf16, #tpu.memory_space<vmem>>, vector<8x16xbf16>
    %c0_17 = arith.constant 0 : index
    %c144 = arith.constant 144 : index
    %25 = vector.load %arg5[%c0_17, %c144] : memref<8x192xbf16, #tpu.memory_space<vmem>>, vector<8x16xbf16>
    %cst_18 = arith.constant dense<0.000000e+00> : vector<8x8xf32>
    %26 = tpu.matmul %23, %24, %cst_18 {dimension_numbers = #tpu.dot_dimension_numbers<[1], [1], [0], [0], [0, 0, 1, 0], [], []>} : vector<8x16xbf16>, vector<8x16xbf16>, vector<8x8xf32> -> vector<8x8xf32>
    %cst_19 = arith.constant dense<0xFF800000> : vector<8xf32>
    %27 = vector.multi_reduction <maximumf>, %26, %cst_19 [1] : vector<8x8xf32> to vector<8xf32>
    %28 = vector.shape_cast %27 : vector<8xf32> to vector<8x1xf32>
    %29 = vector.broadcast %28 : vector<8x1xf32> to vector<8x8xf32>
    %30 = arith.subf %26, %29 : vector<8x8xf32>
    %31 = math.exp %30 : vector<8x8xf32>
    %cst_20 = arith.constant dense<0.000000e+00> : vector<8xf32>
    %32 = vector.multi_reduction <add>, %31, %cst_20 [1] : vector<8x8xf32> to vector<8xf32>
    %33 = vector.shape_cast %32 : vector<8xf32> to vector<8x1xf32>
    %34 = tpu.reciprocal %33 {approx = true} : vector<8x1xf32> -> vector<8x1xf32>
    %35 = vector.broadcast %34 : vector<8x1xf32> to vector<8x8xf32>
    %36 = arith.mulf %31, %35 : vector<8x8xf32>
    %37 = arith.truncf %36 : vector<8x8xf32> to vector<8x8xbf16>
    %cst_21 = arith.constant dense<0.000000e+00> : vector<8x16xf32>
    %38 = tpu.matmul %37, %25, %cst_21 {dimension_numbers = #tpu.dot_dimension_numbers<[1], [0], [0], [1], [0, 0, 1, 1], [], []>} : vector<8x8xbf16>, vector<8x16xbf16>, vector<8x16xf32> -> vector<8x16xf32>
    %39 = arith.truncf %38 : vector<8x16xf32> to vector<8x16xbf16>
    %c0_22 = arith.constant 0 : index
    %c16_23 = arith.constant 16 : index
    %40 = vector.load %arg6[%c0_22, %c16_23] : memref<8x64xbf16, #tpu.memory_space<vmem>>, vector<8x16xbf16>
    tpu.vector_store %arg6[%c0_22, %c16_23], %39 {strides = array<i32>} : memref<8x64xbf16, #tpu.memory_space<vmem>>, vector<8x16xbf16>,
    %c0_24 = arith.constant 0 : index
    %c32 = arith.constant 32 : index
    %41 = vector.load %arg5[%c0_24, %c32] : memref<8x192xbf16, #tpu.memory_space<vmem>>, vector<8x16xbf16>
    %c0_25 = arith.constant 0 : index
    %c96 = arith.constant 96 : index
    %42 = vector.load %arg5[%c0_25, %c96] : memref<8x192xbf16, #tpu.memory_space<vmem>>, vector<8x16xbf16>
    %c0_26 = arith.constant 0 : index
    %c160 = arith.constant 160 : index
    %43 = vector.load %arg5[%c0_26, %c160] : memref<8x192xbf16, #tpu.memory_space<vmem>>, vector<8x16xbf16>
    %cst_27 = arith.constant dense<0.000000e+00> : vector<8x8xf32>
    %44 = tpu.matmul %41, %42, %cst_27 {dimension_numbers = #tpu.dot_dimension_numbers<[1], [1], [0], [0], [0, 0, 1, 0], [], []>} : vector<8x16xbf16>, vector<8x16xbf16>, vector<8x8xf32> -> vector<8x8xf32>
    %cst_28 = arith.constant dense<0xFF800000> : vector<8xf32>
    %45 = vector.multi_reduction <maximumf>, %44, %cst_28 [1] : vector<8x8xf32> to vector<8xf32>
    %46 = vector.shape_cast %45 : vector<8xf32> to vector<8x1xf32>
    %47 = vector.broadcast %46 : vector<8x1xf32> to vector<8x8xf32>
    %48 = arith.subf %44, %47 : vector<8x8xf32>
    %49 = math.exp %48 : vector<8x8xf32>
    %cst_29 = arith.constant dense<0.000000e+00> : vector<8xf32>
    %50 = vector.multi_reduction <add>, %49, %cst_29 [1] : vector<8x8xf32> to vector<8xf32>
    %51 = vector.shape_cast %50 : vector<8xf32> to vector<8x1xf32>
    %52 = tpu.reciprocal %51 {approx = true} : vector<8x1xf32> -> vector<8x1xf32>
    %53 = vector.broadcast %52 : vector<8x1xf32> to vector<8x8xf32>
    %54 = arith.mulf %49, %53 : vector<8x8xf32>
    %55 = arith.truncf %54 : vector<8x8xf32> to vector<8x8xbf16>
    %cst_30 = arith.constant dense<0.000000e+00> : vector<8x16xf32>
    %56 = tpu.matmul %55, %43, %cst_30 {dimension_numbers = #tpu.dot_dimension_numbers<[1], [0], [0], [1], [0, 0, 1, 1], [], []>} : vector<8x8xbf16>, vector<8x16xbf16>, vector<8x16xf32> -> vector<8x16xf32>
    %57 = arith.truncf %56 : vector<8x16xf32> to vector<8x16xbf16>
    %c0_31 = arith.constant 0 : index
    %c32_32 = arith.constant 32 : index
    %58 = vector.load %arg6[%c0_31, %c32_32] : memref<8x64xbf16, #tpu.memory_space<vmem>>, vector<8x16xbf16>
    tpu.vector_store %arg6[%c0_31, %c32_32], %57 {strides = array<i32>} : memref<8x64xbf16, #tpu.memory_space<vmem>>, vector<8x16xbf16>,
    %c0_33 = arith.constant 0 : index
    %c48 = arith.constant 48 : index
    %59 = vector.load %arg5[%c0_33, %c48] : memref<8x192xbf16, #tpu.memory_space<vmem>>, vector<8x16xbf16>
    %c0_34 = arith.constant 0 : index
    %c112 = arith.constant 112 : index
    %60 = vector.load %arg5[%c0_34, %c112] : memref<8x192xbf16, #tpu.memory_space<vmem>>, vector<8x16xbf16>
    %c0_35 = arith.constant 0 : index
    %c176 = arith.constant 176 : index
    %61 = vector.load %arg5[%c0_35, %c176] : memref<8x192xbf16, #tpu.memory_space<vmem>>, vector<8x16xbf16>
    %cst_36 = arith.constant dense<0.000000e+00> : vector<8x8xf32>
    %62 = tpu.matmul %59, %60, %cst_36 {dimension_numbers = #tpu.dot_dimension_numbers<[1], [1], [0], [0], [0, 0, 1, 0], [], []>} : vector<8x16xbf16>, vector<8x16xbf16>, vector<8x8xf32> -> vector<8x8xf32>
    %cst_37 = arith.constant dense<0xFF800000> : vector<8xf32>
    %63 = vector.multi_reduction <maximumf>, %62, %cst_37 [1] : vector<8x8xf32> to vector<8xf32>
    %64 = vector.shape_cast %63 : vector<8xf32> to vector<8x1xf32>
    %65 = vector.broadcast %64 : vector<8x1xf32> to vector<8x8xf32>
    %66 = arith.subf %62, %65 : vector<8x8xf32>
    %67 = math.exp %66 : vector<8x8xf32>
    %cst_38 = arith.constant dense<0.000000e+00> : vector<8xf32>
    %68 = vector.multi_reduction <add>, %67, %cst_38 [1] : vector<8x8xf32> to vector<8xf32>
    %69 = vector.shape_cast %68 : vector<8xf32> to vector<8x1xf32>
    %70 = tpu.reciprocal %69 {approx = true} : vector<8x1xf32> -> vector<8x1xf32>
    %71 = vector.broadcast %70 : vector<8x1xf32> to vector<8x8xf32>
    %72 = arith.mulf %67, %71 : vector<8x8xf32>
    %73 = arith.truncf %72 : vector<8x8xf32> to vector<8x8xbf16>
    %cst_39 = arith.constant dense<0.000000e+00> : vector<8x16xf32>
    %74 = tpu.matmul %73, %61, %cst_39 {dimension_numbers = #tpu.dot_dimension_numbers<[1], [0], [0], [1], [0, 0, 1, 1], [], []>} : vector<8x8xbf16>, vector<8x16xbf16>, vector<8x16xf32> -> vector<8x16xf32>
    %75 = arith.truncf %74 : vector<8x16xf32> to vector<8x16xbf16>
    %c0_40 = arith.constant 0 : index
    %c48_41 = arith.constant 48 : index
    %76 = vector.load %arg6[%c0_40, %c48_41] : memref<8x64xbf16, #tpu.memory_space<vmem>>, vector<8x16xbf16>
    tpu.vector_store %arg6[%c0_40, %c48_41], %75 {strides = array<i32>} : memref<8x64xbf16, #tpu.memory_space<vmem>>, vector<8x16xbf16>,
    %c0_42 = arith.constant 0 : index
    %c0_43 = arith.constant 0 : index
    %77 = vector.load %arg6[%c0_42, %c0_43] : memref<8x64xbf16, #tpu.memory_space<vmem>>, vector<8x64xbf16>
    %c0_44 = arith.constant 0 : index
    %c0_45 = arith.constant 0 : index
    %78 = vector.load %arg3[%c0_44, %c0_45] : memref<64x128xbf16, #tpu.memory_space<vmem>>, vector<64x128xbf16>
    %cst_46 = arith.constant dense<0.000000e+00> : vector<8x128xf32>
    %79 = tpu.matmul %77, %78, %cst_46 {dimension_numbers = #tpu.dot_dimension_numbers<[1], [0], [0], [1], [0, 0, 1, 1], [], []>} : vector<8x64xbf16>, vector<64x128xbf16>, vector<8x128xf32> -> vector<8x128xf32>
    %c0_47 = arith.constant 0 : index
    %c0_48 = arith.constant 0 : index
    %80 = vector.load %arg4[%c0_47, %c0_48] : memref<8x128xf32, #tpu.memory_space<vmem>>, vector<8x128xf32>
    tpu.vector_store %arg4[%c0_47, %c0_48], %79 {strides = array<i32>} : memref<8x128xf32, #tpu.memory_space<vmem>>, vector<8x128xf32>,
    return
  }
  func.func @transform_0(%arg0: i32) -> (i32, i32) {
    %c0_i32 = arith.constant 0 : i32
    %c0_i32_0 = arith.constant 0 : i32
    return %arg0, %c0_i32 : i32, i32
  }
  func.func @transform_1(%arg0: i32) -> (i32, i32) {
    %c0_i32 = arith.constant 0 : i32
    %c0_i32_0 = arith.constant 0 : i32
    %c0_i32_1 = arith.constant 0 : i32
    return %c0_i32, %c0_i32_0 : i32, i32
  }
  func.func @transform_2(%arg0: i32) -> (i32, i32) {
    %c0_i32 = arith.constant 0 : i32
    %c0_i32_0 = arith.constant 0 : i32
    %c0_i32_1 = arith.constant 0 : i32
    return %c0_i32, %c0_i32_0 : i32, i32
  }
  func.func @transform_3(%arg0: i32) -> (i32, i32) {
    %c0_i32 = arith.constant 0 : i32
    %c0_i32_0 = arith.constant 0 : i32
    return %arg0, %c0_i32 : i32, i32
  }
}

</mosaic_0001>

<llo_original>
// kernel: tpu_custom_call.1
$region0: #{tpu_custom_call.1}
  #allocation0 [shape = 'u32[]', space=smem, size = 0x4, offset = 0x4, fixed_abs, tag = 'smem constant byte address 0x4 - core index']
  #allocation1 [shape = 'u32[144,128]{1,0:T(1,128)}', space=vmem, size = 0x12000, scoped, tag = 'internal scratch']
  #allocation2 [shape = 'bf16[8,192]{1,0:T(8,128)(2,1)}', space=vmem, size = 0x1000, scoped, tag = 'scratch operand']
  #allocation3 [shape = 'bf16[8,64]{1,0:T(8,128)(2,1)}', space=vmem, size = 0x800, scoped, tag = 'scratch operand']
  %s0 = inlined_call_operand.vmem [shape: bf16[16,128], index: 0, kind: input, shape index: {}]
  %s1 = inlined_call_operand.vmem [shape: bf16[128,192], index: 1, kind: input, shape index: {}]
  %s2 = inlined_call_operand.vmem [shape: bf16[64,128], index: 2, kind: input, shape index: {}]
  %s3 = inlined_call_operand.hbm [shape: f32[16,128], index: 3, kind: output, shape index: {}]
  %s4 = sld [smem:[#allocation0]]
  $region45: #{tpu_custom_call.1} parent=0
    _
  %s6 = ssub.s32 1, %s4
  %s7 = scalar_select 0, %s6, %s4
  $region1: #{tpu_custom_call.1} parent=0
    #allocation4 [shape = 'u8[8192]{0}', space=vmem, size = 0x2000, scoped, tag = 'output window, operand 0']
    #allocation5 [shape = 's32[2]{0}', space=sflag, size = 0x8, scoped, tag = 'scoped memory for tpu_custom_call.1']
    %8 = vsyncpa [#allocation5], 0
    %s9 = scalar_lea.sflag [#allocation5], 1
    %10 = vsyncpa %s9, 0
    loop: start=0, step=1, limit=4
    $region2: #{tpu_custom_call.1} parent=1 // loop_pre_header
      _
    $region3: #{tpu_custom_call.1} parent=1 // loop_header
      %s12 = sphi 0, %s16
      %p13 = scmp.ge.s32.totalorder %s12, 4
      %s22 = sphi 0, %s24
      %s25 = sphi 0, %s22
      %s26 = sphi 0, %s25
      %s42 = sphi 0, %s26
      %s46 = sphi 0, %s46
      %s48 = sphi 0, %s46
      %s49 = sphi 0, %s48
      %s63 = sphi 0, %s49
      %s67 = sphi 0, %s67
      %s69 = sphi 0, %s67
      %s70 = sphi 0, %s69
      %s84 = sphi 0, %s70
      %s90 = sphi 0, %s92
      %s93 = sphi 0, %s90
      %s94 = sphi 0, %s93
      %s110 = sphi 0, %s94
    $region4: #{tpu_custom_call.1} parent=1 // loop_header_branch
      %15 = sbr.rel (%p13) target = $region8
    $region5: #{tpu_custom_call.1} parent=1 // loop_body
      %s17 = ssub.s32 %s12, 1
      %s18 = ssub.s32 %s12, 2
      %s19 = sadd.s32 %s12, 1
      %s20 = ssub.s32 %s12, %s19
      %p21 = scmp.eq.s32.totalorder %s20, 0
      %s23 = sadd.s32 %s22, 1
      %s24 = scalar_select %p21, %s22, %s23
      %p27 = pneg %p21
      %p28 = scmp.eq.s32.totalorder %s12, 1
      %p29 = por %p27, %p28
      %p30 = scmp.ne.s32.totalorder %s22, %s25
      %p31 = scmp.eq.s32.totalorder %s12, 0
      %p32 = por %p30, %p31
      %p33 = scmp.ne.s32.totalorder %s22, %s25
      %p34 = scmp.eq.s32.totalorder %s17, 1
      %p35 = por %p33, %p34
      %p36 = scmp.ne.s32.totalorder %s25, %s26
      %p37 = scmp.eq.s32.totalorder %s17, 0
      %p38 = por %p36, %p37
      %p39 = scmp.ne.s32.totalorder %s25, %s26
      %p40 = scmp.eq.s32.totalorder %s18, 1
      %p41 = por %p39, %p40
      %p43 = scmp.ne.s32.totalorder %s26, %s42
      %p44 = scmp.eq.s32.totalorder %s18, 0
      %p45 = por %p43, %p44
      %s47 = sadd.s32 %s46, 1
      %p50 = scmp.eq.s32.totalorder %s12, 1
      %p51 = scmp.ne.s32.totalorder %s46, %s48
      %p52 = scmp.eq.s32.totalorder %s12, 0
      %p53 = por %p51, %p52
      %p54 = scmp.ne.s32.totalorder %s46, %s48
      %p55 = scmp.eq.s32.totalorder %s17, 1
      %p56 = por %p54, %p55
      %p57 = scmp.ne.s32.totalorder %s48, %s49
      %p58 = scmp.eq.s32.totalorder %s17, 0
      %p59 = por %p57, %p58
      %p60 = scmp.ne.s32.totalorder %s48, %s49
      %p61 = scmp.eq.s32.totalorder %s18, 1
      %p62 = por %p60, %p61
      %p64 = scmp.ne.s32.totalorder %s49, %s63
      %p65 = scmp.eq.s32.totalorder %s18, 0
      %p66 = por %p64, %p65
      %s68 = sadd.s32 %s67, 1
      %p71 = scmp.eq.s32.totalorder %s12, 1
      %p72 = scmp.ne.s32.totalorder %s67, %s69
      %p73 = scmp.eq.s32.totalorder %s12, 0
      %p74 = por %p72, %p73
      %p75 = scmp.ne.s32.totalorder %s67, %s69
      %p76 = scmp.eq.s32.totalorder %s17, 1
      %p77 = por %p75, %p76
      %p78 = scmp.ne.s32.totalorder %s69, %s70
      %p79 = scmp.eq.s32.totalorder %s17, 0
      %p80 = por %p78, %p79
      %p81 = scmp.ne.s32.totalorder %s69, %s70
      %p82 = scmp.eq.s32.totalorder %s18, 1
      %p83 = por %p81, %p82
      %p85 = scmp.ne.s32.totalorder %s70, %s84
      %p86 = scmp.eq.s32.totalorder %s18, 0
      %p87 = por %p85, %p86
      %s88 = ssub.s32 %s12, %s19
      %p89 = scmp.eq.s32.totalorder %s88, 0
      %s91 = sadd.s32 %s90, 1
      %s92 = scalar_select %p89, %s90, %s91
      %p95 = pneg %p89
      %p96 = scmp.eq.s32.totalorder %s12, 1
      %p97 = por %p95, %p96
      %p98 = scmp.ne.s32.totalorder %s90, %s93
      %p99 = scmp.eq.s32.totalorder %s12, 0
      %p100 = por %p98, %p99
      %p101 = scmp.ne.s32.totalorder %s90, %s93
      %p102 = scmp.eq.s32.totalorder %s17, 1
      %p103 = por %p101, %p102
      %p104 = scmp.ne.s32.totalorder %s93, %s94
      %p105 = scmp.eq.s32.totalorder %s17, 0
      %p106 = por %p104, %p105
      %p107 = scmp.ne.s32.totalorder %s93, %s94
      %p108 = scmp.eq.s32.totalorder %s18, 1
      %p109 = por %p107, %p108
      %p111 = scmp.ne.s32.totalorder %s94, %s110
      %p112 = scmp.eq.s32.totalorder %s18, 0
      %p113 = por %p111, %p112
      %p114 = scmp.le.s32.totalorder 1, %s12
      %p115 = scmp.lt.s32.totalorder %s12, 3
      %p116 = pnand %p114, %p115
      %p117 = pneg %p116
      // Predicated region
      $region9: #{tpu_custom_call.1} parent=5 // pred_check
        _
      $region10: #{tpu_custom_call.1} parent=5 // pred_check_branch
        %119 = sbr.rel (%p116) target = $region12
      $region11: #{tpu_custom_call.1} parent=5 // pred_region
        %s120 = ssub.s32 %s12, 1
        // Predicated region
        $region13: #{tpu_custom_call.1} parent=11 // pred_check
          %p121 = pneg %p59
        $region14: #{tpu_custom_call.1} parent=11 // pred_check_branch
          %123 = sbr.rel (%p121) target = $region16
        $region15: #{tpu_custom_call.1} parent=11 // pred_region
          _
        $region16: #{tpu_custom_call.1} parent=11 // pred_fallthru
          _
        // Predicated region
        $region17: #{tpu_custom_call.1} parent=11 // pred_check
          %p124 = pneg %p80
        $region18: #{tpu_custom_call.1} parent=11 // pred_check_branch
          %126 = sbr.rel (%p124) target = $region20
        $region19: #{tpu_custom_call.1} parent=11 // pred_region
          _
        $region20: #{tpu_custom_call.1} parent=11 // pred_fallthru
          _
      $region12: #{tpu_custom_call.1} parent=5 // pred_fallthru
        _
      %p127 = scmp.lt.s32.totalorder %s12, 2
      // Predicated region
      $region21: #{tpu_custom_call.1} parent=5 // pred_check
        %p128 = pneg %p127
      $region22: #{tpu_custom_call.1} parent=5 // pred_check_branch
        %130 = sbr.rel (%p128) target = $region24
      $region23: #{tpu_custom_call.1} parent=5 // pred_region
        // Predicated region
        $region25: #{tpu_custom_call.1} parent=23 // pred_check
          %p131 = pneg %p32
        $region26: #{tpu_custom_call.1} parent=23 // pred_check_branch
          %133 = sbr.rel (%p131) target = $region28
        $region27: #{tpu_custom_call.1} parent=23 // pred_region
          %p134 = scmp.lt.s32.totalorder %s12, 1
          %s135 = scalar_select %p134, %s12, 1
          %s136 = smul.addr %s135, 4
          %s137 = scalar_lea.vmem %s0, %s136
        $region28: #{tpu_custom_call.1} parent=23 // pred_fallthru
          _
      $region24: #{tpu_custom_call.1} parent=5 // pred_fallthru
        _
      %p138 = scmp.le.s32.totalorder 1, %s12
      %p139 = scmp.lt.s32.totalorder %s12, 3
      %p140 = pnand %p138, %p139
      %p141 = pneg %p140
      // Predicated region
      $region29: #{tpu_custom_call.1} parent=5 // pred_check
        _
      $region30: #{tpu_custom_call.1} parent=5 // pred_check_branch
        %143 = sbr.rel (%p140) target = $region32
      $region31: #{tpu_custom_call.1} parent=5 // pred_region
        %s144 = ssub.s32 %s12, 1
        %p145 = scmp.lt.s32.totalorder %s17, 1
        %s146 = scalar_select %p145, %s17, 1
        %s147 = smul.addr %s146, 4
        %s148 = scalar_lea.vmem %s0, %s147
        %p149 = pneg %p38
        %p150 = pneg %p35
        %p151 = pneg %p59
        %p152 = pneg %p56
        %p153 = pneg %p80
        %p154 = pneg %p77
        %p155 = pneg %p106
        %p156 = pneg %p103
        %s157 = sand.u32 %s93, 1
        %s158 = scalar_lea.sflag [#allocation5], %s157
        %s159 = sand.u32 %s93, 1
        %s160 = smul.addr %s159, 8
        %s161 = scalar_lea.vmem [#allocation4], %s160
        %p162 = scmp.lt.s32.totalorder %s17, 1
        %s163 = scalar_select %p162, %s17, 1
        %s164 = smul.addr %s163, 4
        %s165 = scalar_lea.vmem %s0, %s164
        %v167 = vld [vmem:[%s165] sm:$0xf]
        %v168 = vld [vmem:[%s1] sm:$0xff]
        %v169 = vld [vmem:[%s1 + $0x8] sm:$0xff]
        %v170 = vld [vmem:[%s1 + $0x10] sm:$0xff]
        %v171 = vld [vmem:[%s1 + $0x18] sm:$0xff]
        %v172 = vld [vmem:[%s1 + $0x20] sm:$0xff]
        %v173 = vld [vmem:[%s1 + $0x28] sm:$0xff]
        %v174 = vld [vmem:[%s1 + $0x30] sm:$0xff]
        %v175 = vld [vmem:[%s1 + $0x38] sm:$0xff]
        %v176 = vld [vmem:[%s1 + $0x40] sm:$0xff]
        %v177 = vld [vmem:[%s1 + $0x48] sm:$0xff]
        %v178 = vld [vmem:[%s1 + $0x50] sm:$0xff]
        %v179 = vld [vmem:[%s1 + $0x58] sm:$0xff]
        %v180 = vld [vmem:[%s1 + $0x60] sm:$0xff]
        %v181 = vld [vmem:[%s1 + $0x68] sm:$0xff]
        %v182 = vld [vmem:[%s1 + $0x70] sm:$0xff]
        %v183 = vld [vmem:[%s1 + $0x78] sm:$0xff]
        %v200 = vunpack.c.l.b16 %v168
        %v201 = vunpack.c.h.b16 %v168
        %v202 = vunpack.c.l.b16 %v169
        %v203 = vunpack.c.h.b16 %v169
        %v204 = vunpack.c.l.b16 %v170
        %v205 = vunpack.c.h.b16 %v170
        %v206 = vunpack.c.l.b16 %v171
        %v207 = vunpack.c.h.b16 %v171
        %v208 = vunpack.c.l.b16 %v172
        %v209 = vunpack.c.h.b16 %v172
        %v210 = vunpack.c.l.b16 %v173
        %v211 = vunpack.c.h.b16 %v173
        %v212 = vunpack.c.l.b16 %v174
        %v213 = vunpack.c.h.b16 %v174
        %v214 = vunpack.c.l.b16 %v175
        %v215 = vunpack.c.h.b16 %v175
        %v216 = vunpack.c.l.b16 %v176
        %v217 = vunpack.c.h.b16 %v176
        %v218 = vunpack.c.l.b16 %v177
        %v219 = vunpack.c.h.b16 %v177
        %v220 = vunpack.c.l.b16 %v178
        %v221 = vunpack.c.h.b16 %v178
        %v222 = vunpack.c.l.b16 %v179
        %v223 = vunpack.c.h.b16 %v179
        %v224 = vunpack.c.l.b16 %v180
        %v225 = vunpack.c.h.b16 %v180
        %v226 = vunpack.c.l.b16 %v181
        %v227 = vunpack.c.h.b16 %v181
        %v228 = vunpack.c.l.b16 %v182
        %v229 = vunpack.c.h.b16 %v182
        %v230 = vunpack.c.l.b16 %v183
        %v231 = vunpack.c.h.b16 %v183
        %v232 = vpack.c.b16 %v202, %v200
        %v233 = vpack.c.b16 %v203, %v201
        %v234 = vpack.c.b16 %v206, %v204
        %v235 = vpack.c.b16 %v207, %v205
        %v236 = vpack.c.b16 %v210, %v208
        %v237 = vpack.c.b16 %v211, %v209
        %v238 = vpack.c.b16 %v214, %v212
        %v239 = vpack.c.b16 %v215, %v213
        %v240 = vpack.c.b16 %v218, %v216
        %v241 = vpack.c.b16 %v219, %v217
        %v242 = vpack.c.b16 %v222, %v220
        %v243 = vpack.c.b16 %v223, %v221
        %v244 = vpack.c.b16 %v226, %v224
        %v245 = vpack.c.b16 %v227, %v225
        %v246 = vpack.c.b16 %v230, %v228
        %v247 = vpack.c.b16 %v231, %v229
        %264 = vmatprep.subr.bf16.mxu0 %v233
        %265 = vmatpush1.bf16.msra.mxu0 %v232
        %266 = vmatprep.subr.bf16.mxu0 %v235
        %267 = vmatpush1.bf16.msra.mxu0 %v234
        %268 = vmatprep.subr.bf16.mxu0 %v237
        %269 = vmatpush1.bf16.msra.mxu0 %v236
        %270 = vmatprep.subr.bf16.mxu0 %v239
        %271 = vmatpush1.bf16.msra.mxu0 %v238
        %272 = vmatprep.subr.bf16.mxu0 %v241
        %273 = vmatpush1.bf16.msra.mxu0 %v240
        %274 = vmatprep.subr.bf16.mxu0 %v243
        %275 = vmatpush1.bf16.msra.mxu0 %v242
        %276 = vmatprep.subr.bf16.mxu0 %v245
        %277 = vmatpush1.bf16.msra.mxu0 %v244
        %278 = vmatprep.subr.bf16.mxu0 %v247
        %279 = vmatpush1.bf16.msra.mxu0 %v246
        %280 = vmatprep.subr.bf16.mxu0 0
        %281 = vmatpush1.bf16.msra.mxu0 0
        %282 = vmatprep.subr.bf16.mxu0 0
        %283 = vmatpush1.bf16.msra.mxu0 0
        %284 = vmatprep.subr.bf16.mxu0 0
        %285 = vmatpush1.bf16.msra.mxu0 0
        %286 = vmatprep.subr.bf16.mxu0 0
        %287 = vmatpush1.bf16.msra.mxu0 0
        %288 = vmatprep.subr.bf16.mxu0 0
        %289 = vmatpush1.bf16.msra.mxu0 0
        %290 = vmatprep.subr.bf16.mxu0 0
        %291 = vmatpush1.bf16.msra.mxu0 0
        %292 = vmatprep.subr.bf16.mxu0 0
        %293 = vmatpush1.bf16.msra.mxu0 0
        %294 = vmatprep.subr.bf16.mxu0 0
        %295 = vmatpush1.bf16.msra.mxu0 0
        %296 = vmatprep.mubr.bf16.mxu0 0
        %297 = vmatmul.mubr.bf16.gmra.mrb[0].mxu0 %v167
        %v298 = vpop.f32.mrb[0].mxu0
        %v299 = vadd.f32 0.0, %v298
        %v300 = vpop.f32.mrb[0].mxu0
        %v301 = vadd.f32 0.0, %v300
        %v302 = vpop.f32.mrb[0].mxu0
        %v303 = vpop.f32.mrb[0].mxu0
        %304 = vdwg.mxu0
        %v305 = vpack.c.bf16 %v299, %v299
        %v306 = vpack.c.bf16 %v301, %v301
        %v309 = vunpack.c.l.b16 %v305
        %v310 = vunpack.c.l.b16 %v306
        %v311 = vpack.c.b16 %v310, %v309
        %vm313 = vcmask 1043456
        %vm314 = vcmask 523268
        %vm315 = vmor %vm314, %vm313
        %316 = vst.msk [vmem:[#allocation2] sm:$0xff] %vm315, %v311
        %v317 = vld [vmem:[#allocation2] sm:$0xf]
        %v318 = vld [vmem:[#allocation2 + $0x4] sm:$0xf]
        %v320 = vunpack.c.l.b16 %v317
        %v321 = vpack.c.b16 %v320, %v320
        %322 = vrot.lane.b32.xlu0 %v321, 64
        %v323 = vpop.permute.xlu0 %322
        %vm324 = vcmask 130048
        %v326 = vsel %vm324, %v317, 0
        %v329 = vsel %vm324, %v323, 0
        %331 = vmatprep.subr.bf16.mxu0 0
        %332 = vmatpush1.bf16.xpose.msra.mxu0 %v329
        %333 = vmatprep.subr.bf16.mxu0 0
        %334 = vmatpush1.bf16.xpose.msra.mxu0 0
        %335 = vmatprep.subr.bf16.mxu0 0
        %336 = vmatpush1.bf16.xpose.msra.mxu0 0
        %337 = vmatprep.subr.bf16.mxu0 0
        %338 = vmatpush1.bf16.xpose.msra.mxu0 0
        %339 = vmatprep.subr.bf16.mxu0 0
        %340 = vmatpush1.bf16.xpose.msra.mxu0 0
        %341 = vmatprep.subr.bf16.mxu0 0
        %342 = vmatpush1.bf16.xpose.msra.mxu0 0
        %343 = vmatprep.subr.bf16.mxu0 0
        %344 = vmatpush1.bf16.xpose.msra.mxu0 0
        %345 = vmatprep.subr.bf16.mxu0 0
        %346 = vmatpush1.bf16.xpose.msra.mxu0 0
        %347 = vmatprep.subr.bf16.mxu0 0
        %348 = vmatpush1.bf16.xpose.msra.mxu0 0
        %349 = vmatprep.subr.bf16.mxu0 0
        %350 = vmatpush1.bf16.xpose.msra.mxu0 0
        %351 = vmatprep.subr.bf16.mxu0 0
        %352 = vmatpush1.bf16.xpose.msra.mxu0 0
        %353 = vmatprep.subr.bf16.mxu0 0
        %354 = vmatpush1.bf16.xpose.msra.mxu0 0
        %355 = vmatprep.subr.bf16.mxu0 0
        %356 = vmatpush1.bf16.xpose.msra.mxu0 0
        %357 = vmatprep.subr.bf16.mxu0 0
        %358 = vmatpush1.bf16.xpose.msra.mxu0 0
        %359 = vmatprep.subr.bf16.mxu0 0
        %360 = vmatpush1.bf16.xpose.msra.mxu0 0
        %361 = vmatprep.subr.bf16.mxu0 0
        %362 = vmatpush1.bf16.xpose.msra.mxu0 0
        %363 = vmatprep.mubr.bf16.mxu0 0
        %364 = vmatmul.mubr.bf16.gmra.mrb[0].mxu0 %v326
        %v365 = vpop.f32.mrb[0].mxu0
        %v366 = vadd.f32 0.0, %v365
        %v367 = vpop.f32.mrb[0].mxu0
        %v368 = vpop.f32.mrb[0].mxu0
        %v369 = vpop.f32.mrb[0].mxu0
        %370 = vdwg.mxu0
        %vm371 = vcmask 64512
        %v372 = vsel %vm371, %v366, -inf
        %373 = vmax.xlane.f32.xlu0 %v372
        %v374 = vpop.xlane.xlu0 %373
        %v375 = vsub.f32 %v366, %v374
        %v376 = vmul.f32 %v375, 1.442695
        %v377 = vpow.pop %v376
        %v378 = vsel %vm371, %v377, 0.0
        %379 = vadd.xlane.f32.xlu0 %v378
        %v380 = vpop.xlane.xlu0 %379
        %v381 = vrcp.pop %v380
        %v382 = vmul.f32 %v377, %v381
        %v383 = vpack.c.bf16 %v382, %v382
        %v385 = vsel %vm371, %v383, 0
        %v388 = vsel %vm313, %v318, 0
        %390 = vmatprep.subr.bf16.mxu0 0
        %391 = vmatpush1.bf16.msra.mxu0 %v388
        %392 = vmatprep.subr.bf16.mxu0 0
        %393 = vmatpush1.bf16.msra.mxu0 0
        %394 = vmatprep.subr.bf16.mxu0 0
        %395 = vmatpush1.bf16.msra.mxu0 0
        %396 = vmatprep.subr.bf16.mxu0 0
        %397 = vmatpush1.bf16.msra.mxu0 0
        %398 = vmatprep.subr.bf16.mxu0 0
        %399 = vmatpush1.bf16.msra.mxu0 0
        %400 = vmatprep.subr.bf16.mxu0 0
        %401 = vmatpush1.bf16.msra.mxu0 0
        %402 = vmatprep.subr.bf16.mxu0 0
        %403 = vmatpush1.bf16.msra.mxu0 0
        %404 = vmatprep.subr.bf16.mxu0 0
        %405 = vmatpush1.bf16.msra.mxu0 0
        %406 = vmatprep.subr.bf16.mxu0 0
        %407 = vmatpush1.bf16.msra.mxu0 0
        %408 = vmatprep.subr.bf16.mxu0 0
        %409 = vmatpush1.bf16.msra.mxu0 0
        %410 = vmatprep.subr.bf16.mxu0 0
        %411 = vmatpush1.bf16.msra.mxu0 0
        %412 = vmatprep.subr.bf16.mxu0 0
        %413 = vmatpush1.bf16.msra.mxu0 0
        %414 = vmatprep.subr.bf16.mxu0 0
        %415 = vmatpush1.bf16.msra.mxu0 0
        %416 = vmatprep.subr.bf16.mxu0 0
        %417 = vmatpush1.bf16.msra.mxu0 0
        %418 = vmatprep.subr.bf16.mxu0 0
        %419 = vmatpush1.bf16.msra.mxu0 0
        %420 = vmatprep.subr.bf16.mxu0 0
        %421 = vmatpush1.bf16.msra.mxu0 0
        %422 = vmatprep.mubr.bf16.mxu0 0
        %423 = vmatmul.mubr.bf16.gmra.mrb[0].mxu0 %v385
        %v424 = vpop.f32.mrb[0].mxu0
        %v425 = vadd.f32 0.0, %v424
        %v426 = vpop.f32.mrb[0].mxu0
        %v427 = vpop.f32.mrb[0].mxu0
        %v428 = vpop.f32.mrb[0].mxu0
        %429 = vdwg.mxu0
        %v430 = vpack.c.bf16 %v425, %v425
        %vm431 = vcmask 125952
        %432 = vst.msk [vmem:[#allocation3] sm:$0xf] %vm431, %v430
        %v433 = vld [vmem:[#allocation2] sm:$0xf]
        %v434 = vld [vmem:[#allocation2 + $0x4] sm:$0xf]
        %v436 = vunpack.c.l.b16 %v433
        %v437 = vpack.c.b16 %v436, %v436
        %438 = vrot.lane.b32.xlu0 %v437, 112
        %v439 = vpop.permute.xlu0 %438
        %440 = vrot.lane.b32.xlu0 %v437, 48
        %v441 = vpop.permute.xlu0 %440
        %v443 = vsel %vm324, %v439, 0
        %v446 = vsel %vm324, %v441, 0
        %448 = vmatprep.subr.bf16.mxu0 0
        %449 = vmatpush1.bf16.xpose.msra.mxu0 %v446
        %450 = vmatprep.subr.bf16.mxu0 0
        %451 = vmatpush1.bf16.xpose.msra.mxu0 0
        %452 = vmatprep.subr.bf16.mxu0 0
        %453 = vmatpush1.bf16.xpose.msra.mxu0 0
        %454 = vmatprep.subr.bf16.mxu0 0
        %455 = vmatpush1.bf16.xpose.msra.mxu0 0
        %456 = vmatprep.subr.bf16.mxu0 0
        %457 = vmatpush1.bf16.xpose.msra.mxu0 0
        %458 = vmatprep.subr.bf16.mxu0 0
        %459 = vmatpush1.bf16.xpose.msra.mxu0 0
        %460 = vmatprep.subr.bf16.mxu0 0
        %461 = vmatpush1.bf16.xpose.msra.mxu0 0
        %462 = vmatprep.subr.bf16.mxu0 0
        %463 = vmatpush1.bf16.xpose.msra.mxu0 0
        %464 = vmatprep.subr.bf16.mxu0 0
        %465 = vmatpush1.bf16.xpose.msra.mxu0 0
        %466 = vmatprep.subr.bf16.mxu0 0
        %467 = vmatpush1.bf16.xpose.msra.mxu0 0
        %468 = vmatprep.subr.bf16.mxu0 0
        %469 = vmatpush1.bf16.xpose.msra.mxu0 0
        %470 = vmatprep.subr.bf16.mxu0 0
        %471 = vmatpush1.bf16.xpose.msra.mxu0 0
        %472 = vmatprep.subr.bf16.mxu0 0
        %473 = vmatpush1.bf16.xpose.msra.mxu0 0
        %474 = vmatprep.subr.bf16.mxu0 0
        %475 = vmatpush1.bf16.xpose.msra.mxu0 0
        %476 = vmatprep.subr.bf16.mxu0 0
        %477 = vmatpush1.bf16.xpose.msra.mxu0 0
        %478 = vmatprep.subr.bf16.mxu0 0
        %479 = vmatpush1.bf16.xpose.msra.mxu0 0
        %480 = vmatprep.mubr.bf16.mxu0 0
        %481 = vmatmul.mubr.bf16.gmra.mrb[0].mxu0 %v443
        %v482 = vpop.f32.mrb[0].mxu0
        %v483 = vadd.f32 0.0, %v482
        %v484 = vpop.f32.mrb[0].mxu0
        %v485 = vpop.f32.mrb[0].mxu0
        %v486 = vpop.f32.mrb[0].mxu0
        %487 = vdwg.mxu0
        %v488 = vsel %vm371, %v483, -inf
        %489 = vmax.xlane.f32.xlu0 %v488
        %v490 = vpop.xlane.xlu0 %489
        %v491 = vsub.f32 %v483, %v490
        %v492 = vmul.f32 %v491, 1.442695
        %v493 = vpow.pop %v492
        %v494 = vsel %vm371, %v493, 0.0
        %495 = vadd.xlane.f32.xlu0 %v494
        %v496 = vpop.xlane.xlu0 %495
        %v497 = vrcp.pop %v496
        %v498 = vmul.f32 %v493, %v497
        %v499 = vpack.c.bf16 %v498, %v498
        %v501 = vunpack.c.l.b16 %v434
        %v502 = vpack.c.b16 %v501, %v501
        %503 = vrot.lane.b32.xlu0 %v502, 112
        %v504 = vpop.permute.xlu0 %503
        %v506 = vsel %vm371, %v499, 0
        %v509 = vsel %vm313, %v504, 0
        %511 = vmatprep.subr.bf16.mxu0 0
        %512 = vmatpush1.bf16.msra.mxu0 %v509
        %513 = vmatprep.subr.bf16.mxu0 0
        %514 = vmatpush1.bf16.msra.mxu0 0
        %515 = vmatprep.subr.bf16.mxu0 0
        %516 = vmatpush1.bf16.msra.mxu0 0
        %517 = vmatprep.subr.bf16.mxu0 0
        %518 = vmatpush1.bf16.msra.mxu0 0
        %519 = vmatprep.subr.bf16.mxu0 0
        %520 = vmatpush1.bf16.msra.mxu0 0
        %521 = vmatprep.subr.bf16.mxu0 0
        %522 = vmatpush1.bf16.msra.mxu0 0
        %523 = vmatprep.subr.bf16.mxu0 0
        %524 = vmatpush1.bf16.msra.mxu0 0
        %525 = vmatprep.subr.bf16.mxu0 0
        %526 = vmatpush1.bf16.msra.mxu0 0
        %527 = vmatprep.subr.bf16.mxu0 0
        %528 = vmatpush1.bf16.msra.mxu0 0
        %529 = vmatprep.subr.bf16.mxu0 0
        %530 = vmatpush1.bf16.msra.mxu0 0
        %531 = vmatprep.subr.bf16.mxu0 0
        %532 = vmatpush1.bf16.msra.mxu0 0
        %533 = vmatprep.subr.bf16.mxu0 0
        %534 = vmatpush1.bf16.msra.mxu0 0
        %535 = vmatprep.subr.bf16.mxu0 0
        %536 = vmatpush1.bf16.msra.mxu0 0
        %537 = vmatprep.subr.bf16.mxu0 0
        %538 = vmatpush1.bf16.msra.mxu0 0
        %539 = vmatprep.subr.bf16.mxu0 0
        %540 = vmatpush1.bf16.msra.mxu0 0
        %541 = vmatprep.subr.bf16.mxu0 0
        %542 = vmatpush1.bf16.msra.mxu0 0
        %543 = vmatprep.mubr.bf16.mxu0 0
        %544 = vmatmul.mubr.bf16.gmra.mrb[0].mxu0 %v506
        %v545 = vpop.f32.mrb[0].mxu0
        %v546 = vadd.f32 0.0, %v545
        %v547 = vpop.f32.mrb[0].mxu0
        %v548 = vpop.f32.mrb[0].mxu0
        %v549 = vpop.f32.mrb[0].mxu0
        %550 = vdwg.mxu0
        %v551 = vpack.c.bf16 %v546, %v546
        %v553 = vunpack.c.l.b16 %v551
        %v554 = vpack.c.b16 %v553, %v553
        %555 = vrot.lane.b32.xlu0 %v554, 16
        %v556 = vpop.permute.xlu0 %555
        %vm558 = vcmask 257152
        %559 = vst.msk [vmem:[#allocation3] sm:$0xf] %vm558, %v556
        %v560 = vld [vmem:[#allocation2] sm:$0xf]
        %v561 = vld [vmem:[#allocation2 + $0x4] sm:$0xf]
        %v563 = vunpack.c.l.b16 %v560
        %v564 = vpack.c.b16 %v563, %v563
        %565 = vrot.lane.b32.xlu0 %v564, 96
        %v566 = vpop.permute.xlu0 %565
        %567 = vrot.lane.b32.xlu0 %v564, 32
        %v568 = vpop.permute.xlu0 %567
        %v570 = vsel %vm324, %v566, 0
        %v573 = vsel %vm324, %v568, 0
        %575 = vmatprep.subr.bf16.mxu0 0
        %576 = vmatpush1.bf16.xpose.msra.mxu0 %v573
        %577 = vmatprep.subr.bf16.mxu0 0
        %578 = vmatpush1.bf16.xpose.msra.mxu0 0
        %579 = vmatprep.subr.bf16.mxu0 0
        %580 = vmatpush1.bf16.xpose.msra.mxu0 0
        %581 = vmatprep.subr.bf16.mxu0 0
        %582 = vmatpush1.bf16.xpose.msra.mxu0 0
        %583 = vmatprep.subr.bf16.mxu0 0
        %584 = vmatpush1.bf16.xpose.msra.mxu0 0
        %585 = vmatprep.subr.bf16.mxu0 0
        %586 = vmatpush1.bf16.xpose.msra.mxu0 0
        %587 = vmatprep.subr.bf16.mxu0 0
        %588 = vmatpush1.bf16.xpose.msra.mxu0 0
        %589 = vmatprep.subr.bf16.mxu0 0
        %590 = vmatpush1.bf16.xpose.msra.mxu0 0
        %591 = vmatprep.subr.bf16.mxu0 0
        %592 = vmatpush1.bf16.xpose.msra.mxu0 0
        %593 = vmatprep.subr.bf16.mxu0 0
        %594 = vmatpush1.bf16.xpose.msra.mxu0 0
        %595 = vmatprep.subr.bf16.mxu0 0
        %596 = vmatpush1.bf16.xpose.msra.mxu0 0
        %597 = vmatprep.subr.bf16.mxu0 0
        %598 = vmatpush1.bf16.xpose.msra.mxu0 0
        %599 = vmatprep.subr.bf16.mxu0 0
        %600 = vmatpush1.bf16.xpose.msra.mxu0 0
        %601 = vmatprep.subr.bf16.mxu0 0
        %602 = vmatpush1.bf16.xpose.msra.mxu0 0
        %603 = vmatprep.subr.bf16.mxu0 0
        %604 = vmatpush1.bf16.xpose.msra.mxu0 0
        %605 = vmatprep.subr.bf16.mxu0 0
        %606 = vmatpush1.bf16.xpose.msra.mxu0 0
        %607 = vmatprep.mubr.bf16.mxu0 0
        %608 = vmatmul.mubr.bf16.gmra.mrb[0].mxu0 %v570
        %v609 = vpop.f32.mrb[0].mxu0
        %v610 = vadd.f32 0.0, %v609
        %v611 = vpop.f32.mrb[0].mxu0
        %v612 = vpop.f32.mrb[0].mxu0
        %v613 = vpop.f32.mrb[0].mxu0
        %614 = vdwg.mxu0
        %v615 = vsel %vm371, %v610, -inf
        %616 = vmax.xlane.f32.xlu0 %v615
        %v617 = vpop.xlane.xlu0 %616
        %v618 = vsub.f32 %v610, %v617
        %v619 = vmul.f32 %v618, 1.442695
        %v620 = vpow.pop %v619
        %v621 = vsel %vm371, %v620, 0.0
        %622 = vadd.xlane.f32.xlu0 %v621
        %v623 = vpop.xlane.xlu0 %622
        %v624 = vrcp.pop %v623
        %v625 = vmul.f32 %v620, %v624
        %v626 = vpack.c.bf16 %v625, %v625
        %v628 = vunpack.c.l.b16 %v561
        %v629 = vpack.c.b16 %v628, %v628
        %630 = vrot.lane.b32.xlu0 %v629, 96
        %v631 = vpop.permute.xlu0 %630
        %v633 = vsel %vm371, %v626, 0
        %v636 = vsel %vm313, %v631, 0
        %638 = vmatprep.subr.bf16.mxu0 0
        %639 = vmatpush1.bf16.msra.mxu0 %v636
        %640 = vmatprep.subr.bf16.mxu0 0
        %641 = vmatpush1.bf16.msra.mxu0 0
        %642 = vmatprep.subr.bf16.mxu0 0
        %643 = vmatpush1.bf16.msra.mxu0 0
        %644 = vmatprep.subr.bf16.mxu0 0
        %645 = vmatpush1.bf16.msra.mxu0 0
        %646 = vmatprep.subr.bf16.mxu0 0
        %647 = vmatpush1.bf16.msra.mxu0 0
        %648 = vmatprep.subr.bf16.mxu0 0
        %649 = vmatpush1.bf16.msra.mxu0 0
        %650 = vmatprep.subr.bf16.mxu0 0
        %651 = vmatpush1.bf16.msra.mxu0 0
        %652 = vmatprep.subr.bf16.mxu0 0
        %653 = vmatpush1.bf16.msra.mxu0 0
        %654 = vmatprep.subr.bf16.mxu0 0
        %655 = vmatpush1.bf16.msra.mxu0 0
        %656 = vmatprep.subr.bf16.mxu0 0
        %657 = vmatpush1.bf16.msra.mxu0 0
        %658 = vmatprep.subr.bf16.mxu0 0
        %659 = vmatpush1.bf16.msra.mxu0 0
        %660 = vmatprep.subr.bf16.mxu0 0
        %661 = vmatpush1.bf16.msra.mxu0 0
        %662 = vmatprep.subr.bf16.mxu0 0
        %663 = vmatpush1.bf16.msra.mxu0 0
        %664 = vmatprep.subr.bf16.mxu0 0
        %665 = vmatpush1.bf16.msra.mxu0 0
        %666 = vmatprep.subr.bf16.mxu0 0
        %667 = vmatpush1.bf16.msra.mxu0 0
        %668 = vmatprep.subr.bf16.mxu0 0
        %669 = vmatpush1.bf16.msra.mxu0 0
        %670 = vmatprep.mubr.bf16.mxu0 0
        %671 = vmatmul.mubr.bf16.gmra.mrb[0].mxu0 %v633
        %v672 = vpop.f32.mrb[0].mxu0
        %v673 = vadd.f32 0.0, %v672
        %v674 = vpop.f32.mrb[0].mxu0
        %v675 = vpop.f32.mrb[0].mxu0
        %v676 = vpop.f32.mrb[0].mxu0
        %677 = vdwg.mxu0
        %v678 = vpack.c.bf16 %v673, %v673
        %v680 = vunpack.c.l.b16 %v678
        %v681 = vpack.c.b16 %v680, %v680
        %682 = vrot.lane.b32.xlu0 %v681, 32
        %v683 = vpop.permute.xlu0 %682
        %vm685 = vcmask 388352
        %686 = vst.msk [vmem:[#allocation3] sm:$0xf] %vm685, %v683
        %v687 = vld [vmem:[#allocation2] sm:$0xf]
        %v688 = vld [vmem:[#allocation2 + $0x4] sm:$0xf]
        %v690 = vunpack.c.l.b16 %v687
        %v691 = vpack.c.b16 %v690, %v690
        %692 = vrot.lane.b32.xlu0 %v691, 80
        %v693 = vpop.permute.xlu0 %692
        %694 = vrot.lane.b32.xlu0 %v691, 16
        %v695 = vpop.permute.xlu0 %694
        %v697 = vsel %vm324, %v693, 0
        %v700 = vsel %vm324, %v695, 0
        %702 = vmatprep.subr.bf16.mxu0 0
        %703 = vmatpush1.bf16.xpose.msra.mxu0 %v700
        %704 = vmatprep.subr.bf16.mxu0 0
        %705 = vmatpush1.bf16.xpose.msra.mxu0 0
        %706 = vmatprep.subr.bf16.mxu0 0
        %707 = vmatpush1.bf16.xpose.msra.mxu0 0
        %708 = vmatprep.subr.bf16.mxu0 0
        %709 = vmatpush1.bf16.xpose.msra.mxu0 0
        %710 = vmatprep.subr.bf16.mxu0 0
        %711 = vmatpush1.bf16.xpose.msra.mxu0 0
        %712 = vmatprep.subr.bf16.mxu0 0
        %713 = vmatpush1.bf16.xpose.msra.mxu0 0
        %714 = vmatprep.subr.bf16.mxu0 0
        %715 = vmatpush1.bf16.xpose.msra.mxu0 0
        %716 = vmatprep.subr.bf16.mxu0 0
        %717 = vmatpush1.bf16.xpose.msra.mxu0 0
        %718 = vmatprep.subr.bf16.mxu0 0
        %719 = vmatpush1.bf16.xpose.msra.mxu0 0
        %720 = vmatprep.subr.bf16.mxu0 0
        %721 = vmatpush1.bf16.xpose.msra.mxu0 0
        %722 = vmatprep.subr.bf16.mxu0 0
        %723 = vmatpush1.bf16.xpose.msra.mxu0 0
        %724 = vmatprep.subr.bf16.mxu0 0
        %725 = vmatpush1.bf16.xpose.msra.mxu0 0
        %726 = vmatprep.subr.bf16.mxu0 0
        %727 = vmatpush1.bf16.xpose.msra.mxu0 0
        %728 = vmatprep.subr.bf16.mxu0 0
        %729 = vmatpush1.bf16.xpose.msra.mxu0 0
        %730 = vmatprep.subr.bf16.mxu0 0
        %731 = vmatpush1.bf16.xpose.msra.mxu0 0
        %732 = vmatprep.subr.bf16.mxu0 0
        %733 = vmatpush1.bf16.xpose.msra.mxu0 0
        %734 = vmatprep.mubr.bf16.mxu0 0
        %735 = vmatmul.mubr.bf16.gmra.mrb[0].mxu0 %v697
        %v736 = vpop.f32.mrb[0].mxu0
        %v737 = vadd.f32 0.0, %v736
        %v738 = vpop.f32.mrb[0].mxu0
        %v739 = vpop.f32.mrb[0].mxu0
        %v740 = vpop.f32.mrb[0].mxu0
        %741 = vdwg.mxu0
        %v742 = vsel %vm371, %v737, -inf
        %743 = vmax.xlane.f32.xlu0 %v742
        %v744 = vpop.xlane.xlu0 %743
        %v745 = vsub.f32 %v737, %v744
        %v746 = vmul.f32 %v745, 1.442695
        %v747 = vpow.pop %v746
        %v748 = vsel %vm371, %v747, 0.0
        %749 = vadd.xlane.f32.xlu0 %v748
        %v750 = vpop.xlane.xlu0 %749
        %v751 = vrcp.pop %v750
        %v752 = vmul.f32 %v747, %v751
        %v753 = vpack.c.bf16 %v752, %v752
        %v755 = vunpack.c.l.b16 %v688
        %v756 = vpack.c.b16 %v755, %v755
        %757 = vrot.lane.b32.xlu0 %v756, 80
        %v758 = vpop.permute.xlu0 %757
        %v760 = vsel %vm371, %v753, 0
        %v763 = vsel %vm313, %v758, 0
        %765 = vmatprep.subr.bf16.mxu0 0
        %766 = vmatpush1.bf16.msra.mxu0 %v763
        %767 = vmatprep.subr.bf16.mxu0 0
        %768 = vmatpush1.bf16.msra.mxu0 0
        %769 = vmatprep.subr.bf16.mxu0 0
        %770 = vmatpush1.bf16.msra.mxu0 0
        %771 = vmatprep.subr.bf16.mxu0 0
        %772 = vmatpush1.bf16.msra.mxu0 0
        %773 = vmatprep.subr.bf16.mxu0 0
        %774 = vmatpush1.bf16.msra.mxu0 0
        %775 = vmatprep.subr.bf16.mxu0 0
        %776 = vmatpush1.bf16.msra.mxu0 0
        %777 = vmatprep.subr.bf16.mxu0 0
        %778 = vmatpush1.bf16.msra.mxu0 0
        %779 = vmatprep.subr.bf16.mxu0 0
        %780 = vmatpush1.bf16.msra.mxu0 0
        %781 = vmatprep.subr.bf16.mxu0 0
        %782 = vmatpush1.bf16.msra.mxu0 0
        %783 = vmatprep.subr.bf16.mxu0 0
        %784 = vmatpush1.bf16.msra.mxu0 0
        %785 = vmatprep.subr.bf16.mxu0 0
        %786 = vmatpush1.bf16.msra.mxu0 0
        %787 = vmatprep.subr.bf16.mxu0 0
        %788 = vmatpush1.bf16.msra.mxu0 0
        %789 = vmatprep.subr.bf16.mxu0 0
        %790 = vmatpush1.bf16.msra.mxu0 0
        %791 = vmatprep.subr.bf16.mxu0 0
        %792 = vmatpush1.bf16.msra.mxu0 0
        %793 = vmatprep.subr.bf16.mxu0 0
        %794 = vmatpush1.bf16.msra.mxu0 0
        %795 = vmatprep.subr.bf16.mxu0 0
        %796 = vmatpush1.bf16.msra.mxu0 0
        %797 = vmatprep.mubr.bf16.mxu0 0
        %798 = vmatmul.mubr.bf16.gmra.mrb[0].mxu0 %v760
        %v799 = vpop.f32.mrb[0].mxu0
        %v800 = vadd.f32 0.0, %v799
        %v801 = vpop.f32.mrb[0].mxu0
        %v802 = vpop.f32.mrb[0].mxu0
        %v803 = vpop.f32.mrb[0].mxu0
        %804 = vdwg.mxu0
        %v805 = vpack.c.bf16 %v800, %v800
        %v807 = vunpack.c.l.b16 %v805
        %v808 = vpack.c.b16 %v807, %v807
        %809 = vrot.lane.b32.xlu0 %v808, 48
        %v810 = vpop.permute.xlu0 %809
        %vm812 = vcmask 519552
        %813 = vst.msk [vmem:[#allocation3] sm:$0xf] %vm812, %v810
        %v814 = vld [vmem:[#allocation3] sm:$0xf]
        %v815 = vld [vmem:[%s2] sm:$0xf]
        %v816 = vld [vmem:[%s2 + $0x4] sm:$0xf]
        %v817 = vld [vmem:[%s2 + $0x8] sm:$0xf]
        %v818 = vld [vmem:[%s2 + $0xc] sm:$0xf]
        %v819 = vld [vmem:[%s2 + $0x10] sm:$0xf]
        %v820 = vld [vmem:[%s2 + $0x14] sm:$0xf]
        %v821 = vld [vmem:[%s2 + $0x18] sm:$0xf]
        %v822 = vld [vmem:[%s2 + $0x1c] sm:$0xf]
        %v831 = vunpack.c.l.b16 %v815
        %v832 = vunpack.c.l.b16 %v816
        %v833 = vunpack.c.l.b16 %v817
        %v834 = vunpack.c.l.b16 %v818
        %v835 = vunpack.c.l.b16 %v819
        %v836 = vunpack.c.l.b16 %v820
        %v837 = vunpack.c.l.b16 %v821
        %v838 = vunpack.c.l.b16 %v822
        %v839 = vpack.c.b16 %v832, %v831
        %v840 = vpack.c.b16 %v834, %v833
        %v841 = vpack.c.b16 %v836, %v835
        %v842 = vpack.c.b16 %v838, %v837
        %vm847 = vcmask 523264
        %v849 = vsel %vm847, %v814, 0
        %851 = vmatprep.subr.bf16.mxu0 0
        %852 = vmatpush1.bf16.msra.mxu0 %v839
        %853 = vmatprep.subr.bf16.mxu0 0
        %854 = vmatpush1.bf16.msra.mxu0 %v840
        %855 = vmatprep.subr.bf16.mxu0 0
        %856 = vmatpush1.bf16.msra.mxu0 %v841
        %857 = vmatprep.subr.bf16.mxu0 0
        %858 = vmatpush1.bf16.msra.mxu0 %v842
        %859 = vmatprep.subr.bf16.mxu0 0
        %860 = vmatpush1.bf16.msra.mxu0 0
        %861 = vmatprep.subr.bf16.mxu0 0
        %862 = vmatpush1.bf16.msra.mxu0 0
        %863 = vmatprep.subr.bf16.mxu0 0
        %864 = vmatpush1.bf16.msra.mxu0 0
        %865 = vmatprep.subr.bf16.mxu0 0
        %866 = vmatpush1.bf16.msra.mxu0 0
        %867 = vmatprep.subr.bf16.mxu0 0
        %868 = vmatpush1.bf16.msra.mxu0 0
        %869 = vmatprep.subr.bf16.mxu0 0
        %870 = vmatpush1.bf16.msra.mxu0 0
        %871 = vmatprep.subr.bf16.mxu0 0
        %872 = vmatpush1.bf16.msra.mxu0 0
        %873 = vmatprep.subr.bf16.mxu0 0
        %874 = vmatpush1.bf16.msra.mxu0 0
        %875 = vmatprep.subr.bf16.mxu0 0
        %876 = vmatpush1.bf16.msra.mxu0 0
        %877 = vmatprep.subr.bf16.mxu0 0
        %878 = vmatpush1.bf16.msra.mxu0 0
        %879 = vmatprep.subr.bf16.mxu0 0
        %880 = vmatpush1.bf16.msra.mxu0 0
        %881 = vmatprep.subr.bf16.mxu0 0
        %882 = vmatpush1.bf16.msra.mxu0 0
        %883 = vmatprep.mubr.bf16.mxu0 0
        %884 = vmatmul.mubr.bf16.gmra.mrb[0].mxu0 %v849
        %v885 = vpop.f32.mrb[0].mxu0
        %v886 = vadd.f32 0.0, %v885
        %v887 = vpop.f32.mrb[0].mxu0
        %v888 = vpop.f32.mrb[0].mxu0
        %v889 = vpop.f32.mrb[0].mxu0
        %890 = vdwg.mxu0
        %891 = vst [vmem:[%s161] sm:$0xff] %v886
        %s892 = sand.u32 %s93, 1
        %s893 = scalar_lea.sflag [#allocation5], %s892
        %s894 = sand.u32 %s93, 1
        %s895 = smul.addr %s894, 8
        %s896 = scalar_lea.vmem [#allocation4], %s895
        // Predicated region
        $region33: #{tpu_custom_call.1} parent=31 // pred_check
          %p897 = pneg %p103
        $region34: #{tpu_custom_call.1} parent=31 // pred_check_branch
          %899 = sbr.rel (%p897) target = $region36
        $region35: #{tpu_custom_call.1} parent=31 // pred_region
          %s901 = ssub.s32 128, 128
          %902 = vsyncadd %s893, %s901
          %s903 = smul.addr %s17, 128
          %s904 = scalar_lea.hbm %s3, %s903
          %s906 = sshll.u32 %s896, 4
          %s907 = int_to_ptr.vmem [resolvable:$true] %s906
          %909 = dma.vmem_to_hbm [thread:$0]  %s907, 128, %s904, %s893
        $region36: #{tpu_custom_call.1} parent=31 // pred_fallthru
          _
      $region32: #{tpu_custom_call.1} parent=5 // pred_fallthru
        _
      %p910 = scmp.le.s32.totalorder 2, %s12
      // Predicated region
      $region37: #{tpu_custom_call.1} parent=5 // pred_check
        %p911 = pneg %p910
      $region38: #{tpu_custom_call.1} parent=5 // pred_check_branch
        %913 = sbr.rel (%p911) target = $region40
      $region39: #{tpu_custom_call.1} parent=5 // pred_region
        %s914 = ssub.s32 %s12, 2
        // Predicated region
        $region41: #{tpu_custom_call.1} parent=39 // pred_check
          %p915 = pneg %p109
        $region42: #{tpu_custom_call.1} parent=39 // pred_check_branch
          %917 = sbr.rel (%p915) target = $region44
        $region43: #{tpu_custom_call.1} parent=39 // pred_region
          %s918 = sand.u32 %s94, 1
          %s919 = scalar_lea.sflag [#allocation5], %s918
          %s920 = sand.u32 %s94, 1
          %s921 = smul.addr %s920, 8
          %s922 = scalar_lea.vmem [#allocation4], %s921
          %923 = dma.done %s919, 128
        $region44: #{tpu_custom_call.1} parent=39 // pred_fallthru
          _
      $region40: #{tpu_custom_call.1} parent=5 // pred_fallthru
        _
    $region6: #{tpu_custom_call.1} parent=1 // loop_footer
      %s16 = sadd.s32 1, %s12
    $region7: #{tpu_custom_call.1} parent=1 // loop_footer_branch
      %11 = sbr.rel target = $region3
    $region8: #{tpu_custom_call.1} parent=1 // loop_exit
      _
    %924 = vsyncpa [#allocation5], 1
    %s925 = scalar_lea.sflag [#allocation5], 1
    %926 = vsyncpa %s925, 1

</llo_original>
